<compile_context>
chip_gen: v7x
topology: tpu7x:2x2x1
jax: 0.10.0
libtpu: 0.0.40
codegen_flags: <defaults>
</compile_context>

<pallas_src>
import functools
import math

import jax
import jax.numpy as jnp
from jax.experimental import pallas as pl
from jax.experimental.pallas import tpu as pltpu


def _round_up(a: int, b: int) -> int:
    return -(-a // b) * b


def _pe_kernel(freq_ref, losin_ref, locos_ref, out_ref, *, groups: int, p_rows: int):
    """Write one (TL, W) tile of the packed PE slab.

    Slab layout (lane-dense): slab row `sr` holds `pack` consecutive positions;
    lane column c encodes position sr*pack + c//size, embedding dim c%size.

    Angle split for slab row sr = tile_base + hi*P + r  (r in [0, P)):
        angle(sr, c) = A_hi(hi, c) + A_lo(r, c)
        A_hi = (tile_base + hi*P) * pack * inv_freq(c)            # (1, W), here
        A_lo = (r*pack + pos_in_row(c)) * inv_freq(c) + phase(c)  # (P, W), hoisted
    and sin(A_hi + A_lo) = sin(A_hi)*cos(A_lo) + cos(A_hi)*sin(A_lo):
    only 2*groups*W transcendentals per tile + 3 VPU ops per output element.
    """
    i = pl.program_id(0)
    tl = groups * p_rows
    freq = freq_ref[0:1, :]            # (1, W): pack * inv_freq per lane column
    lo_sin = losin_ref[...]            # (P, W)
    lo_cos = locos_ref[...]            # (P, W)
    base = (i * tl).astype(jnp.float32)
    for hi in range(groups):           # static unroll; groups <= 64
        a_hi = (base + jnp.float32(hi * p_rows)) * freq           # (1, W)
        s_h = jnp.sin(a_hi)
        c_h = jnp.cos(a_hi)
        blk = s_h * lo_cos + c_h * lo_sin                         # (P, W)
        out_ref[hi * p_rows:(hi + 1) * p_rows, :] = blk.astype(out_ref.dtype)


def _build_pe_table(L: int, size: int, frequency: float, dtype) -> jax.Array:
    """Build the (L, size) PE table via a lane-dense, row-tiled Pallas kernel."""
    dtype = jnp.dtype(dtype)
    # Pack consecutive positions into one slab row so the stored last dim is a
    # multiple of 128 (unmasked stores) even for small `size`; pack is a power of 2.
    pack = 128 // math.gcd(size, 128)
    W = pack * size
    slab_rows = -(-L // pack)                       # slab_rows * pack >= L

    # Sublane alignment by output dtype packing: 8 (f32) / 16 (bf16) / 32 (8-bit).
    align = max(8, 32 // dtype.itemsize)

    # Per-generation VMEM-aware output-tile cap (double-buffered out + f32 temps).
    try:
        vmem_bytes = int(pltpu.get_tpu_info().vmem_capacity_bytes)
    except Exception:
        vmem_bytes = 64 << 20                       # v7x-safe fallback
    bytes_cap = max(1 << 20, min(8 << 20, vmem_bytes // 16))
    cap_rows = max(align, (bytes_cap // (W * 4)) // align * align)

    # Tile rows: aim for a handful of grid steps; guarantee >= 2 steps for
    # non-trivial slabs so v7x's two TensorCores both get work.
    target_steps = 6
    tl = max(align, _round_up(-(-slab_rows // target_steps), align))
    if slab_rows > 2 * align:
        tl = min(tl, _round_up(-(-slab_rows // 2), align))
    tl = min(tl, cap_rows)
    if tl >= 32:
        tl = _round_up(tl, 32)                      # keep within-tile factor P = 32
    p_rows = math.gcd(tl, 32)                       # lo-table depth (8 / 16 / 32)
    groups = tl // p_rows

    padded_rows = _round_up(slab_rows, tl)
    grid = (padded_rows // tl,)

    # ---- per-column / lo-table terms (hoisted out of the kernel, plain JAX) ----
    col = jnp.arange(W, dtype=jnp.int32)
    d = col % size                                  # embedding-dim index
    pos_in_row = (col // size).astype(jnp.float32)  # packed-position offset 0..pack-1
    inv_freq = jnp.exp((d // 2).astype(jnp.float32)
                       * jnp.float32(-2.0 * math.log(frequency) / size))
    # cos(x) == sin(x + pi/2): odd dims carry a +pi/2 phase inside the lo-table.
    phase = jnp.where(d % 2 == 0, 0.0, math.pi / 2.0).astype(jnp.float32)
    freq_row = jnp.broadcast_to((jnp.float32(pack) * inv_freq)[None, :], (8, W))
    r = jnp.arange(p_rows, dtype=jnp.float32)[:, None]
    a_lo = (r * jnp.float32(pack) + pos_in_row[None, :]) * inv_freq[None, :] + phase[None, :]
    lo_sin = jnp.sin(a_lo)
    lo_cos = jnp.cos(a_lo)

    slab = pl.pallas_call(
        functools.partial(_pe_kernel, groups=groups, p_rows=p_rows),
        out_shape=jax.ShapeDtypeStruct((padded_rows, W), dtype),
        grid=grid,
        in_specs=[
            pl.BlockSpec((8, W), lambda i: (0, 0)),         # pack * inv_freq
            pl.BlockSpec((p_rows, W), lambda i: (0, 0)),    # sin(A_lo)
            pl.BlockSpec((p_rows, W), lambda i: (0, 0)),    # cos(A_lo)
        ],
        out_specs=pl.BlockSpec((tl, W), lambda i: (i, 0)),
        compiler_params=pltpu.CompilerParams(
            dimension_semantics=("parallel",),
            vmem_limit_bytes=int(min(vmem_bytes // 2, 64 << 20)),
        ),
    )(freq_row, lo_sin, lo_cos)

    # Un-pack (padded_rows, pack*size) -> (positions, size). The [:L] trim is a
    # one-time copy at build (the table is cached); padding <= one tile.
    return slab.reshape(padded_rows * pack, size)[:L]


# The table depends only on (L, size, frequency, dtype) — never on `emb`'s
# values — so cache it like the PyTorch register_buffer.
_PE_CACHE = {}


def positional_encoding_forward(emb: jax.Array,
                                size: int,
                                max_len: int = 5000,
                                frequency: float = 10000.0,
                                dtype=jnp.float32) -> jax.Array:
    """Pallas equivalent of PositionalEncoding.forward(emb) -> (1, emb.shape[1], size)."""
    if size % 2 != 0:
        raise ValueError(
            f"Cannot use sin/cos positional encoding with odd dim (got dim={size})")
    L = int(emb.shape[1])
    if L > max_len:
        raise ValueError(f"sequence slice {L} exceeds max_len {max_len}")

    key = (L, int(size), float(frequency), jnp.dtype(dtype).name)
    tbl = _PE_CACHE.get(key)
    if tbl is None:
        tbl = _build_pe_table(L, size, frequency, dtype)
        _PE_CACHE[key] = tbl
    return tbl[None, :, :]                # (1, L, size) == pe[:, :emb.size(1)]


def _reference(L: int, size: int, frequency: float = 10000.0) -> jax.Array:
    """Pure-JAX reference mirroring the PyTorch buffer construction."""
    position = jnp.arange(0, L, dtype=jnp.float32)[:, None]
    div_term = jnp.exp(
        jnp.arange(0, size, 2, dtype=jnp.float32) * -(math.log(frequency) / size))
    pe = jnp.zeros((L, size), jnp.float32)
    pe = pe.at[:, 0::2].set(jnp.sin(position * div_term))
    pe = pe.at[:, 1::2].set(jnp.cos(position * div_term))
    return pe[None]


if __name__ == "__main__":
    key = jax.random.PRNGKey(0)

    # emb: (seq_len, batch, dim); module returns pe[:, :emb.size(1)] == (1, batch, dim)
    seq_len, batch, dim = 10, 8, 32
    emb = jax.random.normal(key, (seq_len, batch, dim), dtype=jnp.float32)
    out = jax.block_until_ready(
        positional_encoding_forward(emb, size=dim, max_len=5000, frequency=10000.0))
    assert out.shape == (1, batch, dim), out.shape
    assert jnp.allclose(out, _reference(batch, dim), atol=1e-5, rtol=1e-5), \
        "mismatch vs reference (case 1)"

    # Second (still small) case: exercises position packing (pack=2 for dim=64)
    # and a multi-tile grid (slab_rows=20 -> 3 pipelined / core-sharded tiles).
    emb2 = jax.random.normal(key, (4, 40, 64), dtype=jnp.float32)
    out2 = jax.block_until_ready(positional_encoding_forward(emb2, size=64))
    assert out2.shape == (1, 40, 64), out2.shape
    assert jnp.allclose(out2, _reference(40, 64), atol=1e-5, rtol=1e-5), \
        "mismatch vs reference (case 2)"

    # Cached steady-state call: no kernel relaunch, same buffer.
    out_cached = positional_encoding_forward(emb, size=dim)
    assert out_cached.shape == (1, batch, dim)

    print("KERNEL_OK")
</pallas_src>

<mosaic_0001>
module attributes {stable_mosaic.version = 11 : i64} {
  func.func @_pe_kernel(%arg0: i32, %arg1: memref<8x128xf32, #tpu.memory_space<vmem>>, %arg2: memref<8x128xf32, #tpu.memory_space<vmem>>, %arg3: memref<8x128xf32, #tpu.memory_space<vmem>>, %arg4: memref<8x128xf32, #tpu.memory_space<vmem>>) attributes {dimension_semantics = [#tpu.dimension_semantics<parallel>], iteration_bounds = array<i64: 1>, scalar_prefetch = 0 : i64, scratch_operands = 0 : i64, tpu.core_type = #tpu.core_type<tc>, window_params = [{pipeline_mode = #tpu.pipeline_mode<synchronous>, transform_indices = @transform_0, window_bounds = array<i64: 8, 128>}, {pipeline_mode = #tpu.pipeline_mode<synchronous>, transform_indices = @transform_1, window_bounds = array<i64: 8, 128>}, {pipeline_mode = #tpu.pipeline_mode<synchronous>, transform_indices = @transform_2, window_bounds = array<i64: 8, 128>}, {transform_indices = @transform_3, window_bounds = array<i64: 8, 128>}]} {
    %c0 = arith.constant 0 : index
    %c0_0 = arith.constant 0 : index
    %0 = vector.load %arg1[%c0, %c0_0] : memref<8x128xf32, #tpu.memory_space<vmem>>, vector<1x128xf32>
    %c0_1 = arith.constant 0 : index
    %c0_2 = arith.constant 0 : index
    %1 = vector.load %arg2[%c0_1, %c0_2] : memref<8x128xf32, #tpu.memory_space<vmem>>, vector<8x128xf32>
    %c0_3 = arith.constant 0 : index
    %c0_4 = arith.constant 0 : index
    %2 = vector.load %arg3[%c0_3, %c0_4] : memref<8x128xf32, #tpu.memory_space<vmem>>, vector<8x128xf32>
    %c8_i32 = arith.constant 8 : i32
    %3 = arith.muli %arg0, %c8_i32 : i32
    %4 = arith.sitofp %3 : i32 to f32
    %cst = arith.constant 0.000000e+00 : f32
    %5 = arith.addf %4, %cst : f32
    %6 = vector.broadcast %5 : f32 to vector<1x128xf32>
    %7 = arith.mulf %6, %0 : vector<1x128xf32>
    %8 = math.sin %7 : vector<1x128xf32>
    %9 = math.cos %7 : vector<1x128xf32>
    %10 = vector.broadcast %8 : vector<1x128xf32> to vector<8x128xf32>
    %11 = arith.mulf %10, %2 : vector<8x128xf32>
    %12 = vector.broadcast %9 : vector<1x128xf32> to vector<8x128xf32>
    %13 = arith.mulf %12, %1 : vector<8x128xf32>
    %14 = arith.addf %11, %13 : vector<8x128xf32>
    %c0_5 = arith.constant 0 : index
    %c0_6 = arith.constant 0 : index
    %15 = vector.load %arg4[%c0_5, %c0_6] : memref<8x128xf32, #tpu.memory_space<vmem>>, vector<8x128xf32>
    tpu.vector_store %arg4[%c0_5, %c0_6], %14 {strides = array<i32>} : memref<8x128xf32, #tpu.memory_space<vmem>>, vector<8x128xf32>,
    return
  }
  func.func @transform_0(%arg0: i32) -> (i32, i32) {
    %c0_i32 = arith.constant 0 : i32
    %c0_i32_0 = arith.constant 0 : i32
    %c0_i32_1 = arith.constant 0 : i32
    return %c0_i32, %c0_i32_0 : i32, i32
  }
  func.func @transform_1(%arg0: i32) -> (i32, i32) {
    %c0_i32 = arith.constant 0 : i32
    %c0_i32_0 = arith.constant 0 : i32
    %c0_i32_1 = arith.constant 0 : i32
    return %c0_i32, %c0_i32_0 : i32, i32
  }
  func.func @transform_2(%arg0: i32) -> (i32, i32) {
    %c0_i32 = arith.constant 0 : i32
    %c0_i32_0 = arith.constant 0 : i32
    %c0_i32_1 = arith.constant 0 : i32
    return %c0_i32, %c0_i32_0 : i32, i32
  }
  func.func @transform_3(%arg0: i32) -> (i32, i32) {
    %c0_i32 = arith.constant 0 : i32
    %c0_i32_0 = arith.constant 0 : i32
    return %arg0, %c0_i32 : i32, i32
  }
}

</mosaic_0001>

<llo_original>
// kernel: tpu_custom_call.1
$region0: #{tpu_custom_call.1}
  #allocation0 [shape = 'u32[]', space=smem, size = 0x4, offset = 0x4, fixed_abs, tag = 'smem constant byte address 0x4 - core index']
  #allocation1 [shape = 'u32[144,128]{1,0:T(1,128)}', space=vmem, size = 0x12000, scoped, tag = 'internal scratch']
  %s0 = inlined_call_operand.hbm [shape: f32[8,128], index: 0, kind: input, shape index: {}]
  %s1 = inlined_call_operand.hbm [shape: f32[8,128], index: 1, kind: input, shape index: {}]
  %s2 = inlined_call_operand.hbm [shape: f32[8,128], index: 2, kind: input, shape index: {}]
  %s3 = inlined_call_operand.hbm [shape: f32[8,128], index: 3, kind: output, shape index: {}]
  %s4 = sld [smem:[#allocation0]]
  $region34: #{tpu_custom_call.1} parent=0
    _
  %s6 = ssub.s32 1, %s4
  %s7 = scalar_select 0, %s6, %s4
  $region1: #{tpu_custom_call.1} parent=0
    #allocation2 [shape = 'u8[4096]{0}', space=vmem, size = 0x1000, scoped, tag = 'input window, operand 0, single buffered']
    #allocation3 [shape = 's32[1]{0}', space=sflag, size = 0x4, scoped, tag = 'scoped memory for tpu_custom_call.1']
    #allocation4 [shape = 's32[1]{0}', space=sflag, size = 0x4, scoped, tag = 'scoped memory for tpu_custom_call.1']
    #allocation5 [shape = 'u8[4096]{0}', space=vmem, size = 0x1000, scoped, tag = 'input window, operand 1, single buffered']
    #allocation6 [shape = 's32[1]{0}', space=sflag, size = 0x4, scoped, tag = 'scoped memory for tpu_custom_call.1']
    #allocation7 [shape = 'u8[4096]{0}', space=vmem, size = 0x1000, scoped, tag = 'input window, operand 2, single buffered']
    #allocation8 [shape = 'u8[4096]{0}', space=vmem, size = 0x1000, scoped, tag = 'output window, operand 0, single buffered']
    %8 = vsyncpa [#allocation3], 0
    %9 = vsyncpa [#allocation6], 0
    %10 = vsyncpa [#allocation4], 0
    // Predicated region
    $region2: #{tpu_custom_call.1} parent=1 // pred_check
      _
    $region3: #{tpu_custom_call.1} parent=1 // pred_check_branch
      %12 = sbr.rel (0) target = $region5
    $region4: #{tpu_custom_call.1} parent=1 // pred_region
      %s14 = ssub.s32 128, 128
      %15 = vsyncadd [#allocation3], %s14
      %s17 = sshll.u32 [#allocation2], 4
      %s18 = int_to_ptr.vmem [resolvable:$true] %s17
      %20 = dma.hbm_to_vmem [thread:$0]  %s0, 128, %s18, [#allocation3]
    $region5: #{tpu_custom_call.1} parent=1 // pred_fallthru
      _
    // Predicated region
    $region6: #{tpu_custom_call.1} parent=1 // pred_check
      _
    $region7: #{tpu_custom_call.1} parent=1 // pred_check_branch
      %22 = sbr.rel (0) target = $region9
    $region8: #{tpu_custom_call.1} parent=1 // pred_region
      %s24 = ssub.s32 128, 128
      %25 = vsyncadd [#allocation6], %s24
      %s27 = sshll.u32 [#allocation5], 4
      %s28 = int_to_ptr.vmem [resolvable:$true] %s27
      %30 = dma.hbm_to_vmem [thread:$0]  %s1, 128, %s28, [#allocation6]
    $region9: #{tpu_custom_call.1} parent=1 // pred_fallthru
      _
    // Predicated region
    $region10: #{tpu_custom_call.1} parent=1 // pred_check
      _
    $region11: #{tpu_custom_call.1} parent=1 // pred_check_branch
      %32 = sbr.rel (0) target = $region13
    $region12: #{tpu_custom_call.1} parent=1 // pred_region
      %s34 = ssub.s32 128, 128
      %35 = vsyncadd [#allocation6], %s34
      %s37 = sshll.u32 [#allocation7], 4
      %s38 = int_to_ptr.vmem [resolvable:$true] %s37
      %40 = dma.hbm_to_vmem [thread:$0]  %s2, 128, %s38, [#allocation6]
    $region13: #{tpu_custom_call.1} parent=1 // pred_fallthru
      _
    // Predicated region
    $region14: #{tpu_custom_call.1} parent=1 // pred_check
      _
    $region15: #{tpu_custom_call.1} parent=1 // pred_check_branch
      %42 = sbr.rel (0) target = $region17
    $region16: #{tpu_custom_call.1} parent=1 // pred_region
      %43 = dma.done [#allocation3], 128
    $region17: #{tpu_custom_call.1} parent=1 // pred_fallthru
      _
    // Predicated region
    $region18: #{tpu_custom_call.1} parent=1 // pred_check
      _
    $region19: #{tpu_custom_call.1} parent=1 // pred_check_branch
      %45 = sbr.rel (0) target = $region21
    $region20: #{tpu_custom_call.1} parent=1 // pred_region
      %46 = dma.done [#allocation6], 128
    $region21: #{tpu_custom_call.1} parent=1 // pred_fallthru
      _
    // Predicated region
    $region22: #{tpu_custom_call.1} parent=1 // pred_check
      _
    $region23: #{tpu_custom_call.1} parent=1 // pred_check_branch
      %48 = sbr.rel (0) target = $region25
    $region24: #{tpu_custom_call.1} parent=1 // pred_region
      %49 = dma.done [#allocation6], 128
    $region25: #{tpu_custom_call.1} parent=1 // pred_fallthru
      _
    %v50 = vld [vmem:[#allocation2] sm:$0x1]
    %v51 = vld [vmem:[#allocation5] sm:$0xff]
    %v52 = vld [vmem:[#allocation7] sm:$0xff]
    %s53 = smul.u32 0, 8
    %s54 = scvt.s32.f32 %s53
    %s55 = sadd.f32 %s54, 0.0
    %v56 = vstv %s55
    %v57 = vmul.f32 %v56, %v50
    %v58 = vand.u32 2147483647, %v57
    %vm59 = vcmp.le.f32.partialorder %v58, 0.7853982
    %vm60 = vcmp.lt.s32.totalorder %v57, 0
    %v61 = vand.u32 %v57, 2139095040
    %v62 = vshrl.u32 %v61, 23
    %v63 = vsub.s32 %v62, 127
    %v64 = vand.u32 2147483647, %v57
    %v65 = vand.u32 %v64, 8388607
    %v66 = vor.u32 %v65, 8388608
    %v67 = vsub.s32 0, %v66
    %v68 = vadd.s32 %v63, 1
    %vm69 = vcmp.gt.s32.totalorder %v68, 0
    %v70 = vsel %vm69, %v68, 0
    %v71 = vshrl.u32 %v70, 5
    %v72 = vand.u32 %v70, 31
    %v73 = vsub.s32 32, %v72
    %v74 = vshrl.u32 683565275, %v73
    %v75 = vshll.u32 683565275, %v72
    %v76 = vshrl.u32 2475754826, %v73
    %v77 = vor.u32 %v75, %v76
    %v78 = vshll.u32 2475754826, %v72
    %v79 = vshrl.u32 2131351028, %v73
    %v80 = vor.u32 %v78, %v79
    %v81 = vshll.u32 2131351028, %v72
    %v82 = vshrl.u32 2102212464, %v73
    %v83 = vor.u32 %v81, %v82
    %v84 = vshll.u32 2102212464, %v72
    %v85 = vshrl.u32 920167782, %v73
    %v86 = vor.u32 %v84, %v85
    %v87 = vshll.u32 920167782, %v72
    %v88 = vshrl.u32 1326507024, %v73
    %v89 = vor.u32 %v87, %v88
    %vm90 = vcmp.lt.s32.totalorder %v71, 1
    %vm91 = vcmp.lt.s32.totalorder %v71, 2
    %vm92 = vcmp.lt.s32.totalorder %v71, 3
    %vm93 = vcmp.lt.s32.totalorder %v71, 4
    %v94 = vsel %vm90, %v74, %v77
    %v95 = vsel %vm93, %v83, 2102212464
    %v96 = vsel %vm92, %v80, %v95
    %v97 = vsel %vm91, %v94, %v96
    %v98 = vsel %vm90, %v77, %v80
    %v99 = vsel %vm93, %v86, 920167782
    %v100 = vsel %vm92, %v83, %v99
    %v101 = vsel %vm91, %v98, %v100
    %v102 = vsel %vm90, %v80, %v83
    %v103 = vsel %vm93, %v89, 1326507024
    %v104 = vsel %vm92, %v86, %v103
    %v105 = vsel %vm91, %v102, %v104
    %v106 = vshll.u32 %v66, 8
    %v107 = vmul.u32.u64.compose %v106, %v105
    %v108 = vextract.low.u32 %v107
    %v109 = vextract.high.u32 %v107
    %v110 = vmul.u32.u64.compose %v106, %v101
    %v111 = vextract.low.u32 %v110
    %v112 = vextract.high.u32 %v110
    %v113 = vmul.u32 %v106, %v97
    %v114 = vadd.s32 %v109, %v111
    %vm115 = vc.u32 %v109, %v111
    %v116 = vadd.s32 %v112, 1
    %v117 = vsel %vm115, %v116, %v112
    %v118 = vadd.s32 %v113, %v117
    %v119 = vadd.s32 %v118, 536870912
    %v120 = vshrl.u32 %v119, 30
    %v121 = vshll.u32 %v120, 30
    %v122 = vsub.s32 %v118, %v121
    %vm123 = vcmp.lt.s32.totalorder %v122, 0
    %v124 = vsub.s32 0, %v122
    %v125 = vsel %vm123, %v124, %v122
    %v126 = vclz %v125
    %v127 = vsub.s32 %v126, 2
    %vm128 = vcmp.gt.s32.totalorder 0, %v127
    %v129 = vsel %vm128, 0, %v127
    %v130 = vsub.s32 32, %v129
    %v131 = vshll.u32 %v122, %v129
    %v132 = vshrl.u32 %v114, %v130
    %v133 = vor.u32 %v131, %v132
    %v134 = vsub.s32 4294967266, %v129
    %v135 = vadd.s32 %v134, 127
    %v136 = vshll.u32 %v135, 23
    %v137 = vor.u32 4788187, %v136
    %v138 = vand.u32 2147483647, %v137
    %v140 = vcvt.s32.f32 %v133
    %v141 = vmul.f32 %v140, %v138
    %v142 = vxor.u32 %v141, 2147483648
    %v143 = vsel %vm60, %v142, %v141
    %v144 = vsub.s32 4, %v120
    %v145 = vsel %vm60, %v144, %v120
    %v146 = vsel %vm59, %v57, %v143
    %v147 = vsel %vm59, 0, %v145
    %v148 = vcosq.f32.pop %v146
    %v149 = vsinq.f32.pop %v146
    %vm150 = vweird.f32 %v57
    %v151 = vadd.s32 %v147, 3
    %v152 = vand.u32 %v151, 3
    %vm153 = vcmp.lt.s32.totalorder %v152, 2
    %vm154 = vcmp.eq.s32.totalorder %v152, 0
    %v155 = vxor.u32 %v149, 2147483648
    %v156 = vsel %vm154, %v148, %v155
    %vm157 = vcmp.eq.s32.totalorder %v152, 2
    %v158 = vxor.u32 %v148, 2147483648
    %v159 = vsel %vm157, %v158, %v149
    %v160 = vsel %vm153, %v156, %v159
    %v161 = vsel %vm150, nan, %v160
    %v162 = vand.u32 2147483647, %v57
    %vm163 = vcmp.le.f32.partialorder %v162, 0.7853982
    %vm164 = vcmp.lt.s32.totalorder %v57, 0
    %v165 = vand.u32 %v57, 2139095040
    %v166 = vshrl.u32 %v165, 23
    %v167 = vsub.s32 %v166, 127
    %v168 = vand.u32 2147483647, %v57
    %v169 = vand.u32 %v168, 8388607
    %v170 = vor.u32 %v169, 8388608
    %v171 = vsub.s32 0, %v170
    %v172 = vadd.s32 %v167, 1
    %vm173 = vcmp.gt.s32.totalorder %v172, 0
    %v174 = vsel %vm173, %v172, 0
    %v175 = vshrl.u32 %v174, 5
    %v176 = vand.u32 %v174, 31
    %v177 = vsub.s32 32, %v176
    %v178 = vshrl.u32 683565275, %v177
    %v179 = vshll.u32 683565275, %v176
    %v180 = vshrl.u32 2475754826, %v177
    %v181 = vor.u32 %v179, %v180
    %v182 = vshll.u32 2475754826, %v176
    %v183 = vshrl.u32 2131351028, %v177
    %v184 = vor.u32 %v182, %v183
    %v185 = vshll.u32 2131351028, %v176
    %v186 = vshrl.u32 2102212464, %v177
    %v187 = vor.u32 %v185, %v186
    %v188 = vshll.u32 2102212464, %v176
    %v189 = vshrl.u32 920167782, %v177
    %v190 = vor.u32 %v188, %v189
    %v191 = vshll.u32 920167782, %v176
    %v192 = vshrl.u32 1326507024, %v177
    %v193 = vor.u32 %v191, %v192
    %vm194 = vcmp.lt.s32.totalorder %v175, 1
    %vm195 = vcmp.lt.s32.totalorder %v175, 2
    %vm196 = vcmp.lt.s32.totalorder %v175, 3
    %vm197 = vcmp.lt.s32.totalorder %v175, 4
    %v198 = vsel %vm194, %v178, %v181
    %v199 = vsel %vm197, %v187, 2102212464
    %v200 = vsel %vm196, %v184, %v199
    %v201 = vsel %vm195, %v198, %v200
    %v202 = vsel %vm194, %v181, %v184
    %v203 = vsel %vm197, %v190, 920167782
    %v204 = vsel %vm196, %v187, %v203
    %v205 = vsel %vm195, %v202, %v204
    %v206 = vsel %vm194, %v184, %v187
    %v207 = vsel %vm197, %v193, 1326507024
    %v208 = vsel %vm196, %v190, %v207
    %v209 = vsel %vm195, %v206, %v208
    %v210 = vshll.u32 %v170, 8
    %v211 = vmul.u32.u64.compose %v210, %v209
    %v212 = vextract.low.u32 %v211
    %v213 = vextract.high.u32 %v211
    %v214 = vmul.u32.u64.compose %v210, %v205
    %v215 = vextract.low.u32 %v214
    %v216 = vextract.high.u32 %v214
    %v217 = vmul.u32 %v210, %v201
    %v218 = vadd.s32 %v213, %v215
    %vm219 = vc.u32 %v213, %v215
    %v220 = vadd.s32 %v216, 1
    %v221 = vsel %vm219, %v220, %v216
    %v222 = vadd.s32 %v217, %v221
    %v223 = vadd.s32 %v222, 536870912
    %v224 = vshrl.u32 %v223, 30
    %v225 = vshll.u32 %v224, 30
    %v226 = vsub.s32 %v222, %v225
    %vm227 = vcmp.lt.s32.totalorder %v226, 0
    %v228 = vsub.s32 0, %v226
    %v229 = vsel %vm227, %v228, %v226
    %v230 = vclz %v229
    %v231 = vsub.s32 %v230, 2
    %vm232 = vcmp.gt.s32.totalorder 0, %v231
    %v233 = vsel %vm232, 0, %v231
    %v234 = vsub.s32 32, %v233
    %v235 = vshll.u32 %v226, %v233
    %v236 = vshrl.u32 %v218, %v234
    %v237 = vor.u32 %v235, %v236
    %v238 = vsub.s32 4294967266, %v233
    %v239 = vadd.s32 %v238, 127
    %v240 = vshll.u32 %v239, 23
    %v241 = vor.u32 4788187, %v240
    %v242 = vand.u32 2147483647, %v241
    %v244 = vcvt.s32.f32 %v237
    %v245 = vmul.f32 %v244, %v242
    %v246 = vxor.u32 %v245, 2147483648
    %v247 = vsel %vm164, %v246, %v245
    %v248 = vsub.s32 4, %v224
    %v249 = vsel %vm164, %v248, %v224
    %v250 = vsel %vm163, %v57, %v247
    %v251 = vsel %vm163, 0, %v249
    %v252 = vcosq.f32.pop %v250
    %v253 = vsinq.f32.pop %v250
    %vm254 = vweird.f32 %v57
    %v255 = vand.u32 %v251, 3
    %vm256 = vcmp.lt.s32.totalorder %v255, 2
    %vm257 = vcmp.eq.s32.totalorder %v255, 0
    %v258 = vxor.u32 %v253, 2147483648
    %v259 = vsel %vm257, %v252, %v258
    %vm260 = vcmp.eq.s32.totalorder %v255, 2
    %v261 = vxor.u32 %v252, 2147483648
    %v262 = vsel %vm260, %v261, %v253
    %v263 = vsel %vm256, %v259, %v262
    %v264 = vsel %vm254, nan, %v263
    %v265 = vlaneseq
    %v266 = vshrl.u32 %v265, 7
    %v267 = vsub.s32 0, %v266
    %v268 = vrot.slane %v161, %v267
    %v269 = vmul.f32 %v268, %v52
    %v270 = vlaneseq
    %v271 = vshrl.u32 %v270, 7
    %v272 = vsub.s32 0, %v271
    %v273 = vrot.slane %v264, %v272
    %v274 = vmul.f32 %v273, %v51
    %v275 = vadd.f32 %v269, %v274
    %276 = vst [vmem:[#allocation8] sm:$0xff] %v275
    // Predicated region
    $region26: #{tpu_custom_call.1} parent=1 // pred_check
      _
    $region27: #{tpu_custom_call.1} parent=1 // pred_check_branch
      %278 = sbr.rel (0) target = $region29
    $region28: #{tpu_custom_call.1} parent=1 // pred_region
      %s280 = ssub.s32 128, 128
      %281 = vsyncadd [#allocation4], %s280
      %s283 = sshll.u32 [#allocation8], 4
      %s284 = int_to_ptr.vmem [resolvable:$true] %s283
      %286 = dma.vmem_to_hbm [thread:$0]  %s284, 128, %s3, [#allocation4]
    $region29: #{tpu_custom_call.1} parent=1 // pred_fallthru
      _
    // Predicated region
    $region30: #{tpu_custom_call.1} parent=1 // pred_check
      _
    $region31: #{tpu_custom_call.1} parent=1 // pred_check_branch
      %288 = sbr.rel (0) target = $region33
    $region32: #{tpu_custom_call.1} parent=1 // pred_region
      %289 = dma.done [#allocation4], 128
    $region33: #{tpu_custom_call.1} parent=1 // pred_fallthru
      _
    %290 = vsyncpa [#allocation3], 1
    %291 = vsyncpa [#allocation6], 1
    %292 = vsyncpa [#allocation4], 1

</llo_original>
